<compile_context>
chip_gen: v6e
topology: v6e:2x2x1
jax: 0.10.0
libtpu: 0.0.40
codegen_flags: <defaults>
</compile_context>

<pallas_src>
import jax
import jax.numpy as jnp
from jax.experimental import pallas as pl
from jax.experimental.pallas import tpu as pltpu


# ----------------------------------------------------------------------------
# Kernel
# ----------------------------------------------------------------------------
def _make_mlp_kernel(n_layers, activation):
    """Fused MLP kernel (batch-major).

    Ref order: x_ref, w0, b0, ..., w{L-1}, b{L-1}, out_ref.
      x_ref : (tile_B, d_in)
      w_i   : (d_in_i, d_out_i)   -- pre-transposed on the host
      b_i   : (1, d_out_i)        -- broadcasts over the batch (sublane) axis
      out   : (tile_B, d_out)
    Weights/biases are grid-invariant whole-array VMEM residents (no per-step
    re-DMA, no double-buffer footprint).
    """

    def kernel(*refs):
        x_ref = refs[0]
        o_ref = refs[-1]
        params = refs[1:-1]

        h = x_ref[...].astype(jnp.float32)                    # (tile_B, d_in)
        for i in range(n_layers):
            w = params[2 * i][...]                            # (d_in_i, d_out_i)
            b = params[2 * i + 1][...]                        # (1, d_out_i)
            # MXU matmul; accumulate / bias / activation stay in f32 (v5e
            # VPU/EUP have no bf16).  If the weights were pre-cast to bf16 on
            # the host, the astype here casts only the running activation.
            h = jnp.dot(h.astype(w.dtype), w,
                        preferred_element_type=jnp.float32)
            h = h + b.astype(jnp.float32)
            if i != n_layers - 1:
                h = activation(h)
        o_ref[...] = h.astype(o_ref.dtype)

    return kernel


# ----------------------------------------------------------------------------
# VMEM budgeting / tile selection
# ----------------------------------------------------------------------------
def _round_up(x, m):
    return -(-x // m) * m


def _padded_2d_bytes(rows, cols, itemsize):
    """VMEM footprint of a 2D array under (8, 128) native tiling."""
    return _round_up(max(int(rows), 1), 8) * _round_up(max(int(cols), 1), 128) * int(itemsize)


def _vmem_capacity_bytes():
    """Per-TensorCore VMEM capacity; conservative fallback (v7x) if unknown."""
    try:
        cap = int(pltpu.get_tpu_info().vmem_capacity_bytes)
        if cap > 0:
            return cap
    except Exception:
        pass
    return 64 << 20


_TILE_CANDIDATES = (8192, 4096, 2048, 1024, 512, 256, 128)
# Per-grid-step fixed overhead (~0.35 us) expressed in "equivalent batch rows"
# of DMA/compute for a narrow MLP -- used only as a relative weight below.
_STEP_OVERHEAD_ROWS = 2048


def _pick_batch_tile(batch, per_row_bytes, tile_budget_bytes):
    """Pick the batch tile minimizing an (overhead + rows) per-core cost proxy.

    Large tiles amortize the ~0.35us per-step overhead and make DMA chunks big;
    splitting the grid over v7x's two TensorCores (dimension_semantics
    "parallel") rewards step counts that divide evenly.  Tiles that would not
    fit the VMEM budget are excluded.
    """
    fits = [t for t in _TILE_CANDIDATES if t * per_row_bytes <= tile_budget_bytes]
    if not fits:
        fits = [_TILE_CANDIDATES[-1]]           # budget estimate is conservative

    best, best_score = None, None
    for t in fits:                              # largest -> smallest; ties keep larger
        steps = -(-batch // t)
        per_core = -(-steps // 2)               # v7x megacore; harmless on 1-TC chips
        score = per_core * (t + _STEP_OVERHEAD_ROWS)
        if best_score is None or score < best_score:
            best, best_score = t, score
    return best


# ----------------------------------------------------------------------------
# Wrapper
# ----------------------------------------------------------------------------
def mlp_archive_forward(x, weights, biases, *, batch_tile=None,
                        activation=jnp.tanh, compute_dtype=None):
    """Fused MLPArchive.forward.

    Args:
      x: (B, d_in) features.
      weights: list of (d_out_i, d_in_i) arrays (PyTorch nn.Linear layout).
      biases:  list of (d_out_i,) arrays (zeros when bias=False).
      batch_tile: optional manual batch tile override.
      activation: elementwise activation (default tanh) applied to all but the
        last layer.
      compute_dtype: None/float32 (default) or bfloat16 for the matmuls.  Only
        worth enabling when layer widths reach ~128 (v5e) / ~256 (v6e, v7x);
        bf16 compounds rounding error with depth.
    Returns:
      (B, d_out) float32 solutions.
    """
    n_layers = len(weights)
    B, d_in = x.shape
    d_out = int(weights[-1].shape[0])
    out_dims = [int(w.shape[0]) for w in weights]

    compute_dtype = jnp.dtype(jnp.float32 if compute_dtype is None else compute_dtype)

    # One-time host-side param prep: transpose to (d_in_i, d_out_i) so the
    # kernel does plain h @ w matmuls; pre-cast for the bf16 path so no
    # per-grid-step VPU casts and no duplicate f32 copies live in VMEM.
    w_list = [w.T for w in weights]
    if compute_dtype != jnp.dtype(jnp.float32):
        w_list = [w.astype(compute_dtype) for w in w_list]
    b_list = [b.reshape(1, -1).astype(jnp.float32) for b in biases]

    flat_params = []
    for w, b in zip(w_list, b_list):
        flat_params.append(w)
        flat_params.append(b)

    param_vmem = sum(_padded_2d_bytes(p.shape[0], p.shape[1], p.dtype.itemsize)
                     for p in flat_params)

    # Per-batch-row VMEM cost of a grid step: double-buffered x/out tiles plus
    # ~2 live f32 intermediates, everything padded to 128 lanes.
    widest = max([d_in, d_out] + out_dims)
    per_row = 4 * (2 * _round_up(d_in, 128)
                   + 2 * _round_up(d_out, 128)
                   + 2 * _round_up(widest, 128))

    capacity = _vmem_capacity_bytes()
    budget = min(capacity // 2, capacity - (16 << 20))     # generous headroom
    tile_budget = max(budget - param_vmem - (2 << 20), per_row * 128)

    if batch_tile is None:
        batch_tile = _pick_batch_tile(B, per_row, tile_budget)

    n_steps = -(-B // batch_tile)
    B_pad = n_steps * batch_tile
    x_in = x if B_pad == B else jnp.pad(x, ((0, B_pad - B), (0, 0)))

    grid = (n_steps,)
    in_specs = [pl.BlockSpec((batch_tile, d_in), lambda i: (i, 0))]
    for _ in range(n_layers):
        # Grid-invariant params: whole-array VMEM residency.
        in_specs.append(pl.BlockSpec(memory_space=pltpu.MemorySpace.VMEM))
        in_specs.append(pl.BlockSpec(memory_space=pltpu.MemorySpace.VMEM))
    out_spec = pl.BlockSpec((batch_tile, d_out), lambda i: (i, 0))

    # Advisory cost estimate for XLA's scheduler.
    flops = 2 * B_pad * sum(int(w.shape[0]) * int(w.shape[1]) for w in weights)
    transcendentals = B_pad * sum(out_dims[:-1]) if n_layers > 1 else 0
    param_bytes = sum(int(p.size) * p.dtype.itemsize for p in flat_params)
    bytes_accessed = (B_pad * d_in * x.dtype.itemsize + B_pad * d_out * 4
                      + param_bytes)
    cost = pl.CostEstimate(flops=flops, transcendentals=transcendentals,
                           bytes_accessed=bytes_accessed)

    # Scoped VMEM limit: always set, clamped to the physical per-core capacity
    # minus headroom (v7x: 64 MiB physical; v5e/v6e: 128 MiB).
    vmem_est = per_row * batch_tile + param_vmem + (2 << 20)
    hard_cap = capacity - (8 << 20)
    vmem_limit = int(min(hard_cap, max(2 * vmem_est, min(32 << 20, hard_cap))))

    kernel = _make_mlp_kernel(n_layers, activation)

    out = pl.pallas_call(
        kernel,
        out_shape=jax.ShapeDtypeStruct((B_pad, d_out), jnp.float32),
        grid_spec=pltpu.PrefetchScalarGridSpec(
            num_scalar_prefetch=0,
            grid=grid,
            in_specs=in_specs,
            out_specs=out_spec,
        ),
        compiler_params=pltpu.CompilerParams(
            dimension_semantics=("parallel",),
            vmem_limit_bytes=vmem_limit,
        ),
        cost_estimate=cost,
    )(x_in, *flat_params)

    return out if B_pad == B else out[:B]


# ----------------------------------------------------------------------------
# Param init / reference (host-side utilities; serialize/deserialize etc. of
# the original module are plain numpy bookkeeping and need no kernel).
# ----------------------------------------------------------------------------
def init_mlp_params(layer_specs, key):
    """Torch-default-like init.

    Weights in (out, in) layout, W ~ U[-1/sqrt(fan_in), 1/sqrt(fan_in)];
    bias from the same distribution when enabled, zeros when bias=False.
    """
    weights, biases = [], []
    for spec in layer_specs:
        d_in, d_out = spec[0], spec[1]
        has_bias = spec[2] if len(spec) == 3 else True
        key, wk, bk = jax.random.split(key, 3)
        bound = float(d_in) ** -0.5
        w = jax.random.uniform(wk, (d_out, d_in), jnp.float32, -bound, bound)
        if has_bias:
            b = jax.random.uniform(bk, (d_out,), jnp.float32, -bound, bound)
        else:
            b = jnp.zeros((d_out,), jnp.float32)
        weights.append(w)
        biases.append(b)
    return weights, biases


def mlp_reference(x, weights, biases):
    """Pure-JAX reference matching MLPArchive.forward (activation=Tanh)."""
    h = x
    n = len(weights)
    for i, (w, b) in enumerate(zip(weights, biases)):
        h = h @ w.T + b
        if i != n - 1:
            h = jnp.tanh(h)
    return h


if __name__ == "__main__":
    # MLPArchive(layer_specs=[(16, 32), (32, 32), (32, 8)], activation=nn.Tanh)
    layer_specs = [(16, 32), (32, 32), (32, 8)]
    batch = 256  # picker -> tile=128, grid=(2,): both v7x cores busy, pipelined

    key = jax.random.PRNGKey(0)
    key, xk = jax.random.split(key)
    x = jax.random.normal(xk, (batch, layer_specs[0][0]), jnp.float32)

    weights, biases = init_mlp_params(layer_specs, key)

    out = mlp_archive_forward(x, weights, biases)
    out = jax.block_until_ready(out)

    ref = mlp_reference(x, weights, biases)
    assert out.shape == (batch, layer_specs[-1][1])
    assert jnp.allclose(out, ref, atol=1e-4, rtol=1e-4), "mismatch vs reference"

    print("KERNEL_OK")
</pallas_src>

<mosaic_0001>
module attributes {stable_mosaic.version = 11 : i64} {
  func.func @kernel(%arg0: i32, %arg1: memref<128x16xf32, #tpu.memory_space<vmem>>, %arg2: memref<16x32xf32, #tpu.memory_space<vmem>>, %arg3: memref<1x32xf32, #tpu.memory_space<vmem>>, %arg4: memref<32x32xf32, #tpu.memory_space<vmem>>, %arg5: memref<1x32xf32, #tpu.memory_space<vmem>>, %arg6: memref<32x8xf32, #tpu.memory_space<vmem>>, %arg7: memref<1x8xf32, #tpu.memory_space<vmem>>, %arg8: memref<128x8xf32, #tpu.memory_space<vmem>>) attributes {dimension_semantics = [#tpu.dimension_semantics<parallel>], iteration_bounds = array<i64: 2>, scalar_prefetch = 0 : i64, scratch_operands = 0 : i64, tpu.core_type = #tpu.core_type<tc>, window_params = [{transform_indices = @transform_0, window_bounds = array<i64: 128, 16>}, {pipeline_mode = #tpu.pipeline_mode<synchronous>, transform_indices = @transform_1, window_bounds = array<i64: 16, 32>}, {pipeline_mode = #tpu.pipeline_mode<synchronous>, transform_indices = @transform_2, window_bounds = array<i64: 1, 32>}, {pipeline_mode = #tpu.pipeline_mode<synchronous>, transform_indices = @transform_3, window_bounds = array<i64: 32, 32>}, {pipeline_mode = #tpu.pipeline_mode<synchronous>, transform_indices = @transform_4, window_bounds = array<i64: 1, 32>}, {pipeline_mode = #tpu.pipeline_mode<synchronous>, transform_indices = @transform_5, window_bounds = array<i64: 32, 8>}, {pipeline_mode = #tpu.pipeline_mode<synchronous>, transform_indices = @transform_6, window_bounds = array<i64: 1, 8>}, {transform_indices = @transform_7, window_bounds = array<i64: 128, 8>}]} {
    %c0 = arith.constant 0 : index
    %c0_0 = arith.constant 0 : index
    %0 = vector.load %arg1[%c0, %c0_0] : memref<128x16xf32, #tpu.memory_space<vmem>>, vector<128x16xf32>
    %c0_1 = arith.constant 0 : index
    %c0_2 = arith.constant 0 : index
    %1 = vector.load %arg2[%c0_1, %c0_2] : memref<16x32xf32, #tpu.memory_space<vmem>>, vector<16x32xf32>
    %c0_3 = arith.constant 0 : index
    %c0_4 = arith.constant 0 : index
    %2 = vector.load %arg3[%c0_3, %c0_4] : memref<1x32xf32, #tpu.memory_space<vmem>>, vector<1x32xf32>
    %cst = arith.constant dense<0.000000e+00> : vector<128x32xf32>
    %3 = tpu.matmul %0, %1, %cst {dimension_numbers = #tpu.dot_dimension_numbers<[1], [0], [0], [1], [0, 0, 1, 1], [], []>} : vector<128x16xf32>, vector<16x32xf32>, vector<128x32xf32> -> vector<128x32xf32>
    %4 = vector.broadcast %2 : vector<1x32xf32> to vector<128x32xf32>
    %5 = arith.addf %3, %4 : vector<128x32xf32>
    %6 = math.tanh %5 : vector<128x32xf32>
    %c0_5 = arith.constant 0 : index
    %c0_6 = arith.constant 0 : index
    %7 = vector.load %arg4[%c0_5, %c0_6] : memref<32x32xf32, #tpu.memory_space<vmem>>, vector<32x32xf32>
    %c0_7 = arith.constant 0 : index
    %c0_8 = arith.constant 0 : index
    %8 = vector.load %arg5[%c0_7, %c0_8] : memref<1x32xf32, #tpu.memory_space<vmem>>, vector<1x32xf32>
    %cst_9 = arith.constant dense<0.000000e+00> : vector<128x32xf32>
    %9 = tpu.matmul %6, %7, %cst_9 {dimension_numbers = #tpu.dot_dimension_numbers<[1], [0], [0], [1], [0, 0, 1, 1], [], []>} : vector<128x32xf32>, vector<32x32xf32>, vector<128x32xf32> -> vector<128x32xf32>
    %10 = vector.broadcast %8 : vector<1x32xf32> to vector<128x32xf32>
    %11 = arith.addf %9, %10 : vector<128x32xf32>
    %12 = math.tanh %11 : vector<128x32xf32>
    %c0_10 = arith.constant 0 : index
    %c0_11 = arith.constant 0 : index
    %13 = vector.load %arg6[%c0_10, %c0_11] : memref<32x8xf32, #tpu.memory_space<vmem>>, vector<32x8xf32>
    %c0_12 = arith.constant 0 : index
    %c0_13 = arith.constant 0 : index
    %14 = vector.load %arg7[%c0_12, %c0_13] : memref<1x8xf32, #tpu.memory_space<vmem>>, vector<1x8xf32>
    %cst_14 = arith.constant dense<0.000000e+00> : vector<128x8xf32>
    %15 = tpu.matmul %12, %13, %cst_14 {dimension_numbers = #tpu.dot_dimension_numbers<[1], [0], [0], [1], [0, 0, 1, 1], [], []>} : vector<128x32xf32>, vector<32x8xf32>, vector<128x8xf32> -> vector<128x8xf32>
    %16 = vector.broadcast %14 : vector<1x8xf32> to vector<128x8xf32>
    %17 = arith.addf %15, %16 : vector<128x8xf32>
    %c0_15 = arith.constant 0 : index
    %c0_16 = arith.constant 0 : index
    %18 = vector.load %arg8[%c0_15, %c0_16] : memref<128x8xf32, #tpu.memory_space<vmem>>, vector<128x8xf32>
    tpu.vector_store %arg8[%c0_15, %c0_16], %17 {strides = array<i32>} : memref<128x8xf32, #tpu.memory_space<vmem>>, vector<128x8xf32>,
    return
  }
  func.func @transform_0(%arg0: i32) -> (i32, i32) {
    %c0_i32 = arith.constant 0 : i32
    %c0_i32_0 = arith.constant 0 : i32
    return %arg0, %c0_i32 : i32, i32
  }
  func.func @transform_1(%arg0: i32) -> (i32, i32) {
    %c0_i32 = arith.constant 0 : i32
    %c0_i32_0 = arith.constant 0 : i32
    %c0_i32_1 = arith.constant 0 : i32
    return %c0_i32, %c0_i32_0 : i32, i32
  }
  func.func @transform_2(%arg0: i32) -> (i32, i32) {
    %c0_i32 = arith.constant 0 : i32
    %c0_i32_0 = arith.constant 0 : i32
    %c0_i32_1 = arith.constant 0 : i32
    return %c0_i32, %c0_i32_0 : i32, i32
  }
  func.func @transform_3(%arg0: i32) -> (i32, i32) {
    %c0_i32 = arith.constant 0 : i32
    %c0_i32_0 = arith.constant 0 : i32
    %c0_i32_1 = arith.constant 0 : i32
    return %c0_i32, %c0_i32_0 : i32, i32
  }
  func.func @transform_4(%arg0: i32) -> (i32, i32) {
    %c0_i32 = arith.constant 0 : i32
    %c0_i32_0 = arith.constant 0 : i32
    %c0_i32_1 = arith.constant 0 : i32
    return %c0_i32, %c0_i32_0 : i32, i32
  }
  func.func @transform_5(%arg0: i32) -> (i32, i32) {
    %c0_i32 = arith.constant 0 : i32
    %c0_i32_0 = arith.constant 0 : i32
    %c0_i32_1 = arith.constant 0 : i32
    return %c0_i32, %c0_i32_0 : i32, i32
  }
  func.func @transform_6(%arg0: i32) -> (i32, i32) {
    %c0_i32 = arith.constant 0 : i32
    %c0_i32_0 = arith.constant 0 : i32
    %c0_i32_1 = arith.constant 0 : i32
    return %c0_i32, %c0_i32_0 : i32, i32
  }
  func.func @transform_7(%arg0: i32) -> (i32, i32) {
    %c0_i32 = arith.constant 0 : i32
    %c0_i32_0 = arith.constant 0 : i32
    return %arg0, %c0_i32 : i32, i32
  }
}

</mosaic_0001>

<llo_original>
// kernel: tpu_custom_call.1
$region0: #{tpu_custom_call.1}
  #allocation0 [shape = 'u32[]', space=smem, size = 0x4, offset = 0x4, fixed_abs, tag = 'smem constant byte address 0x4 - core index']
  #allocation1 [shape = 'u32[144,128]{1,0:T(1,128)}', space=vmem, size = 0x12000, scoped, tag = 'internal scratch']
  %s0 = inlined_call_operand.vmem [shape: f32[256,16], index: 0, kind: input, shape index: {}]
  %s1 = inlined_call_operand.vmem [shape: f32[16,32], index: 1, kind: input, shape index: {}]
  %s2 = inlined_call_operand.vmem [shape: f32[1,32], index: 2, kind: input, shape index: {}]
  %s3 = inlined_call_operand.vmem [shape: f32[32,32], index: 3, kind: input, shape index: {}]
  %s4 = inlined_call_operand.vmem [shape: f32[1,32], index: 4, kind: input, shape index: {}]
  %s5 = inlined_call_operand.vmem [shape: f32[32,8], index: 5, kind: input, shape index: {}]
  %s6 = inlined_call_operand.vmem [shape: f32[1,8], index: 6, kind: input, shape index: {}]
  %s7 = inlined_call_operand.vmem [shape: f32[256,8], index: 7, kind: output, shape index: {}]
  %s8 = sld [smem:[#allocation0]]
  $region61: #{tpu_custom_call.1} parent=0
    _
  %s10 = ssub.s32 1, %s8
  %s11 = scalar_select 0, %s10, %s8
  loop: start=0, step=1, limit=4
  $region2: #{tpu_custom_call.1} parent=0 // loop_pre_header
    _
  $region3: #{tpu_custom_call.1} parent=0 // loop_header
    %s13 = sphi 0, %s17
    %p14 = scmp.ge.s32.totalorder %s13, 4
    %s23 = sphi 0, %s25
    %s26 = sphi 0, %s23
    %s27 = sphi 0, %s26
    %s43 = sphi 0, %s27
    %s47 = sphi 0, %s47
    %s49 = sphi 0, %s47
    %s50 = sphi 0, %s49
    %s64 = sphi 0, %s50
    %s68 = sphi 0, %s68
    %s70 = sphi 0, %s68
    %s71 = sphi 0, %s70
    %s85 = sphi 0, %s71
    %s89 = sphi 0, %s89
    %s91 = sphi 0, %s89
    %s92 = sphi 0, %s91
    %s106 = sphi 0, %s92
    %s110 = sphi 0, %s110
    %s112 = sphi 0, %s110
    %s113 = sphi 0, %s112
    %s127 = sphi 0, %s113
    %s131 = sphi 0, %s131
    %s133 = sphi 0, %s131
    %s134 = sphi 0, %s133
    %s148 = sphi 0, %s134
    %s152 = sphi 0, %s152
    %s154 = sphi 0, %s152
    %s155 = sphi 0, %s154
    %s169 = sphi 0, %s155
    %s175 = sphi 0, %s177
    %s178 = sphi 0, %s175
    %s179 = sphi 0, %s178
    %s195 = sphi 0, %s179
  $region4: #{tpu_custom_call.1} parent=0 // loop_header_branch
    %16 = sbr.rel (%p14) target = $region8
  $region5: #{tpu_custom_call.1} parent=0 // loop_body
    %s18 = ssub.s32 %s13, 1
    %s19 = ssub.s32 %s13, 2
    %s20 = sadd.s32 %s13, 1
    %s21 = ssub.s32 %s13, %s20
    %p22 = scmp.eq.s32.totalorder %s21, 0
    %s24 = sadd.s32 %s23, 1
    %s25 = scalar_select %p22, %s23, %s24
    %p28 = pneg %p22
    %p29 = scmp.eq.s32.totalorder %s13, 1
    %p30 = por %p28, %p29
    %p31 = scmp.ne.s32.totalorder %s23, %s26
    %p32 = scmp.eq.s32.totalorder %s13, 0
    %p33 = por %p31, %p32
    %p34 = scmp.ne.s32.totalorder %s23, %s26
    %p35 = scmp.eq.s32.totalorder %s18, 1
    %p36 = por %p34, %p35
    %p37 = scmp.ne.s32.totalorder %s26, %s27
    %p38 = scmp.eq.s32.totalorder %s18, 0
    %p39 = por %p37, %p38
    %p40 = scmp.ne.s32.totalorder %s26, %s27
    %p41 = scmp.eq.s32.totalorder %s19, 1
    %p42 = por %p40, %p41
    %p44 = scmp.ne.s32.totalorder %s27, %s43
    %p45 = scmp.eq.s32.totalorder %s19, 0
    %p46 = por %p44, %p45
    %s48 = sadd.s32 %s47, 1
    %p51 = scmp.eq.s32.totalorder %s13, 1
    %p52 = scmp.ne.s32.totalorder %s47, %s49
    %p53 = scmp.eq.s32.totalorder %s13, 0
    %p54 = por %p52, %p53
    %p55 = scmp.ne.s32.totalorder %s47, %s49
    %p56 = scmp.eq.s32.totalorder %s18, 1
    %p57 = por %p55, %p56
    %p58 = scmp.ne.s32.totalorder %s49, %s50
    %p59 = scmp.eq.s32.totalorder %s18, 0
    %p60 = por %p58, %p59
    %p61 = scmp.ne.s32.totalorder %s49, %s50
    %p62 = scmp.eq.s32.totalorder %s19, 1
    %p63 = por %p61, %p62
    %p65 = scmp.ne.s32.totalorder %s50, %s64
    %p66 = scmp.eq.s32.totalorder %s19, 0
    %p67 = por %p65, %p66
    %s69 = sadd.s32 %s68, 1
    %p72 = scmp.eq.s32.totalorder %s13, 1
    %p73 = scmp.ne.s32.totalorder %s68, %s70
    %p74 = scmp.eq.s32.totalorder %s13, 0
    %p75 = por %p73, %p74
    %p76 = scmp.ne.s32.totalorder %s68, %s70
    %p77 = scmp.eq.s32.totalorder %s18, 1
    %p78 = por %p76, %p77
    %p79 = scmp.ne.s32.totalorder %s70, %s71
    %p80 = scmp.eq.s32.totalorder %s18, 0
    %p81 = por %p79, %p80
    %p82 = scmp.ne.s32.totalorder %s70, %s71
    %p83 = scmp.eq.s32.totalorder %s19, 1
    %p84 = por %p82, %p83
    %p86 = scmp.ne.s32.totalorder %s71, %s85
    %p87 = scmp.eq.s32.totalorder %s19, 0
    %p88 = por %p86, %p87
    %s90 = sadd.s32 %s89, 1
    %p93 = scmp.eq.s32.totalorder %s13, 1
    %p94 = scmp.ne.s32.totalorder %s89, %s91
    %p95 = scmp.eq.s32.totalorder %s13, 0
    %p96 = por %p94, %p95
    %p97 = scmp.ne.s32.totalorder %s89, %s91
    %p98 = scmp.eq.s32.totalorder %s18, 1
    %p99 = por %p97, %p98
    %p100 = scmp.ne.s32.totalorder %s91, %s92
    %p101 = scmp.eq.s32.totalorder %s18, 0
    %p102 = por %p100, %p101
    %p103 = scmp.ne.s32.totalorder %s91, %s92
    %p104 = scmp.eq.s32.totalorder %s19, 1
    %p105 = por %p103, %p104
    %p107 = scmp.ne.s32.totalorder %s92, %s106
    %p108 = scmp.eq.s32.totalorder %s19, 0
    %p109 = por %p107, %p108
    %s111 = sadd.s32 %s110, 1
    %p114 = scmp.eq.s32.totalorder %s13, 1
    %p115 = scmp.ne.s32.totalorder %s110, %s112
    %p116 = scmp.eq.s32.totalorder %s13, 0
    %p117 = por %p115, %p116
    %p118 = scmp.ne.s32.totalorder %s110, %s112
    %p119 = scmp.eq.s32.totalorder %s18, 1
    %p120 = por %p118, %p119
    %p121 = scmp.ne.s32.totalorder %s112, %s113
    %p122 = scmp.eq.s32.totalorder %s18, 0
    %p123 = por %p121, %p122
    %p124 = scmp.ne.s32.totalorder %s112, %s113
    %p125 = scmp.eq.s32.totalorder %s19, 1
    %p126 = por %p124, %p125
    %p128 = scmp.ne.s32.totalorder %s113, %s127
    %p129 = scmp.eq.s32.totalorder %s19, 0
    %p130 = por %p128, %p129
    %s132 = sadd.s32 %s131, 1
    %p135 = scmp.eq.s32.totalorder %s13, 1
    %p136 = scmp.ne.s32.totalorder %s131, %s133
    %p137 = scmp.eq.s32.totalorder %s13, 0
    %p138 = por %p136, %p137
    %p139 = scmp.ne.s32.totalorder %s131, %s133
    %p140 = scmp.eq.s32.totalorder %s18, 1
    %p141 = por %p139, %p140
    %p142 = scmp.ne.s32.totalorder %s133, %s134
    %p143 = scmp.eq.s32.totalorder %s18, 0
    %p144 = por %p142, %p143
    %p145 = scmp.ne.s32.totalorder %s133, %s134
    %p146 = scmp.eq.s32.totalorder %s19, 1
    %p147 = por %p145, %p146
    %p149 = scmp.ne.s32.totalorder %s134, %s148
    %p150 = scmp.eq.s32.totalorder %s19, 0
    %p151 = por %p149, %p150
    %s153 = sadd.s32 %s152, 1
    %p156 = scmp.eq.s32.totalorder %s13, 1
    %p157 = scmp.ne.s32.totalorder %s152, %s154
    %p158 = scmp.eq.s32.totalorder %s13, 0
    %p159 = por %p157, %p158
    %p160 = scmp.ne.s32.totalorder %s152, %s154
    %p161 = scmp.eq.s32.totalorder %s18, 1
    %p162 = por %p160, %p161
    %p163 = scmp.ne.s32.totalorder %s154, %s155
    %p164 = scmp.eq.s32.totalorder %s18, 0
    %p165 = por %p163, %p164
    %p166 = scmp.ne.s32.totalorder %s154, %s155
    %p167 = scmp.eq.s32.totalorder %s19, 1
    %p168 = por %p166, %p167
    %p170 = scmp.ne.s32.totalorder %s155, %s169
    %p171 = scmp.eq.s32.totalorder %s19, 0
    %p172 = por %p170, %p171
    %s173 = ssub.s32 %s13, %s20
    %p174 = scmp.eq.s32.totalorder %s173, 0
    %s176 = sadd.s32 %s175, 1
    %s177 = scalar_select %p174, %s175, %s176
    %p180 = pneg %p174
    %p181 = scmp.eq.s32.totalorder %s13, 1
    %p182 = por %p180, %p181
    %p183 = scmp.ne.s32.totalorder %s175, %s178
    %p184 = scmp.eq.s32.totalorder %s13, 0
    %p185 = por %p183, %p184
    %p186 = scmp.ne.s32.totalorder %s175, %s178
    %p187 = scmp.eq.s32.totalorder %s18, 1
    %p188 = por %p186, %p187
    %p189 = scmp.ne.s32.totalorder %s178, %s179
    %p190 = scmp.eq.s32.totalorder %s18, 0
    %p191 = por %p189, %p190
    %p192 = scmp.ne.s32.totalorder %s178, %s179
    %p193 = scmp.eq.s32.totalorder %s19, 1
    %p194 = por %p192, %p193
    %p196 = scmp.ne.s32.totalorder %s179, %s195
    %p197 = scmp.eq.s32.totalorder %s19, 0
    %p198 = por %p196, %p197
    %p199 = scmp.le.s32.totalorder 1, %s13
    %p200 = scmp.lt.s32.totalorder %s13, 3
    %p201 = pnand %p199, %p200
    %p202 = pneg %p201
    // Predicated region
    $region9: #{tpu_custom_call.1} parent=5 // pred_check
      _
    $region10: #{tpu_custom_call.1} parent=5 // pred_check_branch
      %204 = sbr.rel (%p201) target = $region12
    $region11: #{tpu_custom_call.1} parent=5 // pred_region
      %s205 = ssub.s32 %s13, 1
      // Predicated region
      $region13: #{tpu_custom_call.1} parent=11 // pred_check
        %p206 = pneg %p60
      $region14: #{tpu_custom_call.1} parent=11 // pred_check_branch
        %208 = sbr.rel (%p206) target = $region16
      $region15: #{tpu_custom_call.1} parent=11 // pred_region
        _
      $region16: #{tpu_custom_call.1} parent=11 // pred_fallthru
        _
      // Predicated region
      $region17: #{tpu_custom_call.1} parent=11 // pred_check
        %p209 = pneg %p81
      $region18: #{tpu_custom_call.1} parent=11 // pred_check_branch
        %211 = sbr.rel (%p209) target = $region20
      $region19: #{tpu_custom_call.1} parent=11 // pred_region
        _
      $region20: #{tpu_custom_call.1} parent=11 // pred_fallthru
        _
      // Predicated region
      $region21: #{tpu_custom_call.1} parent=11 // pred_check
        %p212 = pneg %p102
      $region22: #{tpu_custom_call.1} parent=11 // pred_check_branch
        %214 = sbr.rel (%p212) target = $region24
      $region23: #{tpu_custom_call.1} parent=11 // pred_region
        _
      $region24: #{tpu_custom_call.1} parent=11 // pred_fallthru
        _
      // Predicated region
      $region25: #{tpu_custom_call.1} parent=11 // pred_check
        %p215 = pneg %p123
      $region26: #{tpu_custom_call.1} parent=11 // pred_check_branch
        %217 = sbr.rel (%p215) target = $region28
      $region27: #{tpu_custom_call.1} parent=11 // pred_region
        _
      $region28: #{tpu_custom_call.1} parent=11 // pred_fallthru
        _
      // Predicated region
      $region29: #{tpu_custom_call.1} parent=11 // pred_check
        %p218 = pneg %p144
      $region30: #{tpu_custom_call.1} parent=11 // pred_check_branch
        %220 = sbr.rel (%p218) target = $region32
      $region31: #{tpu_custom_call.1} parent=11 // pred_region
        _
      $region32: #{tpu_custom_call.1} parent=11 // pred_fallthru
        _
      // Predicated region
      $region33: #{tpu_custom_call.1} parent=11 // pred_check
        %p221 = pneg %p165
      $region34: #{tpu_custom_call.1} parent=11 // pred_check_branch
        %223 = sbr.rel (%p221) target = $region36
      $region35: #{tpu_custom_call.1} parent=11 // pred_region
        _
      $region36: #{tpu_custom_call.1} parent=11 // pred_fallthru
        _
    $region12: #{tpu_custom_call.1} parent=5 // pred_fallthru
      _
    %p224 = scmp.lt.s32.totalorder %s13, 2
    // Predicated region
    $region37: #{tpu_custom_call.1} parent=5 // pred_check
      %p225 = pneg %p224
    $region38: #{tpu_custom_call.1} parent=5 // pred_check_branch
      %227 = sbr.rel (%p225) target = $region40
    $region39: #{tpu_custom_call.1} parent=5 // pred_region
      // Predicated region
      $region41: #{tpu_custom_call.1} parent=39 // pred_check
        %p228 = pneg %p33
      $region42: #{tpu_custom_call.1} parent=39 // pred_check_branch
        %230 = sbr.rel (%p228) target = $region44
      $region43: #{tpu_custom_call.1} parent=39 // pred_region
        %s231 = smul.u32 16, %s13
        %p232 = scmp.lt.s32.totalorder %s231, 31
        %s233 = scalar_select %p232, %s231, 31
        %s234 = smul.addr %s233, 8
        %s235 = scalar_lea.vmem %s0, %s234
        %s236 = smul.u32 16, %s13
      $region44: #{tpu_custom_call.1} parent=39 // pred_fallthru
        _
    $region40: #{tpu_custom_call.1} parent=5 // pred_fallthru
      _
    %p237 = scmp.le.s32.totalorder 1, %s13
    %p238 = scmp.lt.s32.totalorder %s13, 3
    %p239 = pnand %p237, %p238
    %p240 = pneg %p239
    // Predicated region
    $region45: #{tpu_custom_call.1} parent=5 // pred_check
      _
    $region46: #{tpu_custom_call.1} parent=5 // pred_check_branch
      %242 = sbr.rel (%p239) target = $region48
    $region47: #{tpu_custom_call.1} parent=5 // pred_region
      %s243 = ssub.s32 %s13, 1
      %s244 = smul.u32 16, %s18
      %p245 = scmp.lt.s32.totalorder %s244, 31
      %s246 = scalar_select %p245, %s244, 31
      %s247 = smul.addr %s246, 8
      %s248 = scalar_lea.vmem %s0, %s247
      %p249 = pneg %p39
      %p250 = pneg %p36
      %p251 = pneg %p60
      %p252 = pneg %p57
      %p253 = pneg %p81
      %p254 = pneg %p78
      %p255 = pneg %p102
      %p256 = pneg %p99
      %p257 = pneg %p123
      %p258 = pneg %p120
      %p259 = pneg %p144
      %p260 = pneg %p141
      %p261 = pneg %p165
      %p262 = pneg %p162
      %p263 = pneg %p191
      %p264 = pneg %p188
      %s265 = smul.u32 16, %s18
      %p266 = scmp.lt.s32.totalorder %s265, 31
      %s267 = scalar_select %p266, %s265, 31
      %s268 = smul.addr %s267, 8
      %s269 = scalar_lea.vmem %s7, %s268
      %s270 = smul.u32 16, %s18
      %p271 = scmp.lt.s32.totalorder %s270, 31
      %s272 = scalar_select %p271, %s270, 31
      %s273 = smul.addr %s272, 8
      %s274 = scalar_lea.vmem %s0, %s273
      %s275 = smul.u32 16, %s18
      %s276 = smul.u32 16, %s18
      %p277 = scmp.lt.s32.totalorder %s276, 31
      %s278 = scalar_select %p277, %s276, 31
      %s279 = smul.addr %s278, 8
      %s280 = scalar_lea.vmem %s7, %s279
      %s281 = smul.u32 16, %s18
      %v282 = vld [vmem:[%s274] sm:$0xff]
      %v283 = vld [vmem:[%s274 + $0x8] sm:$0xff]
      %v284 = vld [vmem:[%s274 + $0x10] sm:$0xff]
      %v285 = vld [vmem:[%s274 + $0x18] sm:$0xff]
      %v286 = vld [vmem:[%s274 + $0x20] sm:$0xff]
      %v287 = vld [vmem:[%s274 + $0x28] sm:$0xff]
      %v288 = vld [vmem:[%s274 + $0x30] sm:$0xff]
      %v289 = vld [vmem:[%s274 + $0x38] sm:$0xff]
      %v290 = vld [vmem:[%s274 + $0x40] sm:$0xff]
      %v291 = vld [vmem:[%s274 + $0x48] sm:$0xff]
      %v292 = vld [vmem:[%s274 + $0x50] sm:$0xff]
      %v293 = vld [vmem:[%s274 + $0x58] sm:$0xff]
      %v294 = vld [vmem:[%s274 + $0x60] sm:$0xff]
      %v295 = vld [vmem:[%s274 + $0x68] sm:$0xff]
      %v296 = vld [vmem:[%s274 + $0x70] sm:$0xff]
      %v297 = vld [vmem:[%s274 + $0x78] sm:$0xff]
      %v298 = vld [vmem:[%s1] sm:$0xff]
      %v299 = vld [vmem:[%s1 + $0x8] sm:$0xff]
      %v300 = vld [vmem:[%s2] sm:$0x1]
      %v302 = vlaneseq
      %v303 = vshrl.u32 %v302, 7
      %v304 = vsub.s32 0, %v303
      %v305 = vrot.slane %v300, %v304
      %vm307 = vcmask 130048
      %v309 = vsel %vm307, %v282, 0
      %v312 = vsel %vm307, %v283, 0
      %v315 = vsel %vm307, %v284, 0
      %v318 = vsel %vm307, %v285, 0
      %v321 = vsel %vm307, %v286, 0
      %v324 = vsel %vm307, %v287, 0
      %v327 = vsel %vm307, %v288, 0
      %v330 = vsel %vm307, %v289, 0
      %v333 = vsel %vm307, %v290, 0
      %v336 = vsel %vm307, %v291, 0
      %v339 = vsel %vm307, %v292, 0
      %v342 = vsel %vm307, %v293, 0
      %v345 = vsel %vm307, %v294, 0
      %v348 = vsel %vm307, %v295, 0
      %v351 = vsel %vm307, %v296, 0
      %v354 = vsel %vm307, %v297, 0
      %356 = vmatprep.subr.mxu0 0.0
      %357 = vmatpush1.msra.mxu0 0.0
      %358 = vmatprep.subr.mxu0 0.0
      %359 = vmatpush1.msra.mxu0 0.0
      %360 = vmatprep.subr.mxu0 0.0
      %361 = vmatpush1.msra.mxu0 0.0
      %362 = vmatprep.subr.mxu0 0.0
      %363 = vmatpush1.msra.mxu0 0.0
      %364 = vmatprep.subr.mxu0 0.0
      %365 = vmatpush1.msra.mxu0 0.0
      %366 = vmatprep.subr.mxu0 0.0
      %367 = vmatpush1.msra.mxu0 0.0
      %368 = vmatprep.subr.mxu0 0.0
      %369 = vmatpush1.msra.mxu0 0.0
      %370 = vmatprep.subr.mxu0 0.0
      %371 = vmatpush1.msra.mxu0 0.0
      %372 = vmatprep.subr.mxu0 0.0
      %373 = vmatpush1.msra.mxu0 0.0
      %374 = vmatprep.subr.mxu0 0.0
      %375 = vmatpush1.msra.mxu0 0.0
      %376 = vmatprep.subr.mxu0 0.0
      %377 = vmatpush1.msra.mxu0 0.0
      %378 = vmatprep.subr.mxu0 0.0
      %379 = vmatpush1.msra.mxu0 0.0
      %380 = vmatprep.subr.mxu0 0.0
      %381 = vmatpush1.msra.mxu0 0.0
      %382 = vmatprep.subr.mxu0 0.0
      %383 = vmatpush1.msra.mxu0 0.0
      %384 = vmatprep.subr.mxu0 0.0
      %385 = vmatpush1.msra.mxu0 %v299
      %386 = vmatprep.subr.mxu0 0.0
      %387 = vmatpush1.msra.mxu0 %v298
      %388 = vmatprep.subr.mxu0 0.0
      %389 = vmatpush2.msra.mxu0 0.0
      %390 = vmatprep.subr.mxu0 0.0
      %391 = vmatpush2.msra.mxu0 0.0
      %392 = vmatprep.subr.mxu0 0.0
      %393 = vmatpush2.msra.mxu0 0.0
      %394 = vmatprep.subr.mxu0 0.0
      %395 = vmatpush2.msra.mxu0 0.0
      %396 = vmatprep.subr.mxu0 0.0
      %397 = vmatpush2.msra.mxu0 0.0
      %398 = vmatprep.subr.mxu0 0.0
      %399 = vmatpush2.msra.mxu0 0.0
      %400 = vmatprep.subr.mxu0 0.0
      %401 = vmatpush2.msra.mxu0 0.0
      %402 = vmatprep.subr.mxu0 0.0
      %403 = vmatpush2.msra.mxu0 0.0
      %404 = vmatprep.subr.mxu0 0.0
      %405 = vmatpush2.msra.mxu0 0.0
      %406 = vmatprep.subr.mxu0 0.0
      %407 = vmatpush2.msra.mxu0 0.0
      %408 = vmatprep.subr.mxu0 0.0
      %409 = vmatpush2.msra.mxu0 0.0
      %410 = vmatprep.subr.mxu0 0.0
      %411 = vmatpush2.msra.mxu0 0.0
      %412 = vmatprep.subr.mxu0 0.0
      %413 = vmatpush2.msra.mxu0 0.0
      %414 = vmatprep.subr.mxu0 0.0
      %415 = vmatpush2.msra.mxu0 0.0
      %416 = vmatprep.subr.mxu0 0.0
      %417 = vmatpush2.msra.mxu0 0.0
      %418 = vmatprep.subr.mxu0 0.0
      %419 = vmatpush2.msra.mxu0 0.0
      %420 = vmatprep.mubr.f32.mxu0 0.0
      %421 = vmatmul.mubr.f32.gmra.mxu0 %v309
      %v422 = vpop.f32.mrf.mxu0
      %v423 = vadd.f32 %v305, %v422
      %v424 = vpop.f32.mrf.mxu0
      %425 = vmatprep.mubr.f32.mxu0 0.0
      %426 = vmatmul.mubr.f32.gmra.mxu0 %v312
      %v427 = vpop.f32.mrf.mxu0
      %v428 = vadd.f32 %v305, %v427
      %v429 = vpop.f32.mrf.mxu0
      %430 = vmatprep.mubr.f32.mxu0 0.0
      %431 = vmatmul.mubr.f32.gmra.mxu0 %v315
      %v432 = vpop.f32.mrf.mxu0
      %v433 = vadd.f32 %v305, %v432
      %v434 = vpop.f32.mrf.mxu0
      %435 = vmatprep.mubr.f32.mxu0 0.0
      %436 = vmatmul.mubr.f32.gmra.mxu0 %v318
      %v437 = vpop.f32.mrf.mxu0
      %v438 = vadd.f32 %v305, %v437
      %v439 = vpop.f32.mrf.mxu0
      %440 = vmatprep.mubr.f32.mxu0 0.0
      %441 = vmatmul.mubr.f32.gmra.mxu0 %v321
      %v442 = vpop.f32.mrf.mxu0
      %v443 = vadd.f32 %v305, %v442
      %v444 = vpop.f32.mrf.mxu0
      %445 = vmatprep.mubr.f32.mxu0 0.0
      %446 = vmatmul.mubr.f32.gmra.mxu0 %v324
      %v447 = vpop.f32.mrf.mxu0
      %v448 = vadd.f32 %v305, %v447
      %v449 = vpop.f32.mrf.mxu0
      %450 = vmatprep.mubr.f32.mxu0 0.0
      %451 = vmatmul.mubr.f32.gmra.mxu0 %v327
      %v452 = vpop.f32.mrf.mxu0
      %v453 = vadd.f32 %v305, %v452
      %v454 = vpop.f32.mrf.mxu0
      %455 = vmatprep.mubr.f32.mxu0 0.0
      %456 = vmatmul.mubr.f32.gmra.mxu0 %v330
      %v457 = vpop.f32.mrf.mxu0
      %v458 = vadd.f32 %v305, %v457
      %v459 = vpop.f32.mrf.mxu0
      %460 = vmatprep.mubr.f32.mxu0 0.0
      %461 = vmatmul.mubr.f32.gmra.mxu0 %v333
      %v462 = vpop.f32.mrf.mxu0
      %v463 = vadd.f32 %v305, %v462
      %v464 = vpop.f32.mrf.mxu0
      %465 = vmatprep.mubr.f32.mxu0 0.0
      %466 = vmatmul.mubr.f32.gmra.mxu0 %v336
      %v467 = vpop.f32.mrf.mxu0
      %v468 = vadd.f32 %v305, %v467
      %v469 = vpop.f32.mrf.mxu0
      %470 = vmatprep.mubr.f32.mxu0 0.0
      %471 = vmatmul.mubr.f32.gmra.mxu0 %v339
      %v472 = vpop.f32.mrf.mxu0
      %v473 = vadd.f32 %v305, %v472
      %v474 = vpop.f32.mrf.mxu0
      %475 = vmatprep.mubr.f32.mxu0 0.0
      %476 = vmatmul.mubr.f32.gmra.mxu0 %v342
      %v477 = vpop.f32.mrf.mxu0
      %v478 = vadd.f32 %v305, %v477
      %v479 = vpop.f32.mrf.mxu0
      %480 = vmatprep.mubr.f32.mxu0 0.0
      %481 = vmatmul.mubr.f32.gmra.mxu0 %v345
      %v482 = vpop.f32.mrf.mxu0
      %v483 = vadd.f32 %v305, %v482
      %v484 = vpop.f32.mrf.mxu0
      %485 = vmatprep.mubr.f32.mxu0 0.0
      %486 = vmatmul.mubr.f32.gmra.mxu0 %v348
      %v487 = vpop.f32.mrf.mxu0
      %v488 = vadd.f32 %v305, %v487
      %v489 = vpop.f32.mrf.mxu0
      %490 = vmatprep.mubr.f32.mxu0 0.0
      %491 = vmatmul.mubr.f32.gmra.mxu0 %v351
      %v492 = vpop.f32.mrf.mxu0
      %v493 = vadd.f32 %v305, %v492
      %v494 = vpop.f32.mrf.mxu0
      %495 = vmatprep.mubr.f32.mxu0 0.0
      %496 = vmatmul.mubr.f32.gmra.mxu0 %v354
      %v497 = vpop.f32.mrf.mxu0
      %v498 = vadd.f32 %v305, %v497
      %v499 = vpop.f32.mrf.mxu0
      %500 = vdwg.mxu0
      %v501 = vtanh.pop %v423
      %v502 = vtanh.pop %v428
      %v503 = vtanh.pop %v433
      %v504 = vtanh.pop %v438
      %v505 = vtanh.pop %v443
      %v506 = vtanh.pop %v448
      %v507 = vtanh.pop %v453
      %v508 = vtanh.pop %v458
      %v509 = vtanh.pop %v463
      %v510 = vtanh.pop %v468
      %v511 = vtanh.pop %v473
      %v512 = vtanh.pop %v478
      %v513 = vtanh.pop %v483
      %v514 = vtanh.pop %v488
      %v515 = vtanh.pop %v493
      %v516 = vtanh.pop %v498
      %v517 = vld [vmem:[%s3] sm:$0xff]
      %v518 = vld [vmem:[%s3 + $0x8] sm:$0xff]
      %v519 = vld [vmem:[%s3 + $0x10] sm:$0xff]
      %v520 = vld [vmem:[%s3 + $0x18] sm:$0xff]
      %v521 = vld [vmem:[%s4] sm:$0x1]
      %v523 = vlaneseq
      %v524 = vshrl.u32 %v523, 7
      %v525 = vsub.s32 0, %v524
      %v526 = vrot.slane %v521, %v525
      %vm528 = vcmask 261120
      %v530 = vsel %vm528, %v501, 0
      %v533 = vsel %vm528, %v502, 0
      %v536 = vsel %vm528, %v503, 0
      %v539 = vsel %vm528, %v504, 0
      %v542 = vsel %vm528, %v505, 0
      %v545 = vsel %vm528, %v506, 0
      %v548 = vsel %vm528, %v507, 0
      %v551 = vsel %vm528, %v508, 0
      %v554 = vsel %vm528, %v509, 0
      %v557 = vsel %vm528, %v510, 0
      %v560 = vsel %vm528, %v511, 0
      %v563 = vsel %vm528, %v512, 0
      %v566 = vsel %vm528, %v513, 0
      %v569 = vsel %vm528, %v514, 0
      %v572 = vsel %vm528, %v515, 0
      %v575 = vsel %vm528, %v516, 0
      %577 = vmatprep.subr.mxu0 0.0
      %578 = vmatpush1.msra.mxu0 0.0
      %579 = vmatprep.subr.mxu0 0.0
      %580 = vmatpush1.msra.mxu0 0.0
      %581 = vmatprep.subr.mxu0 0.0
      %582 = vmatpush1.msra.mxu0 0.0
      %583 = vmatprep.subr.mxu0 0.0
      %584 = vmatpush1.msra.mxu0 0.0
      %585 = vmatprep.subr.mxu0 0.0
      %586 = vmatpush1.msra.mxu0 0.0
      %587 = vmatprep.subr.mxu0 0.0
      %588 = vmatpush1.msra.mxu0 0.0
      %589 = vmatprep.subr.mxu0 0.0
      %590 = vmatpush1.msra.mxu0 0.0
      %591 = vmatprep.subr.mxu0 0.0
      %592 = vmatpush1.msra.mxu0 0.0
      %593 = vmatprep.subr.mxu0 0.0
      %594 = vmatpush1.msra.mxu0 0.0
      %595 = vmatprep.subr.mxu0 0.0
      %596 = vmatpush1.msra.mxu0 0.0
      %597 = vmatprep.subr.mxu0 0.0
      %598 = vmatpush1.msra.mxu0 0.0
      %599 = vmatprep.subr.mxu0 0.0
      %600 = vmatpush1.msra.mxu0 0.0
      %601 = vmatprep.subr.mxu0 0.0
      %602 = vmatpush1.msra.mxu0 %v520
      %603 = vmatprep.subr.mxu0 0.0
      %604 = vmatpush1.msra.mxu0 %v519
      %605 = vmatprep.subr.mxu0 0.0
      %606 = vmatpush1.msra.mxu0 %v518
      %607 = vmatprep.subr.mxu0 0.0
      %608 = vmatpush1.msra.mxu0 %v517
      %609 = vmatprep.subr.mxu0 0.0
      %610 = vmatpush2.msra.mxu0 0.0
      %611 = vmatprep.subr.mxu0 0.0
      %612 = vmatpush2.msra.mxu0 0.0
      %613 = vmatprep.subr.mxu0 0.0
      %614 = vmatpush2.msra.mxu0 0.0
      %615 = vmatprep.subr.mxu0 0.0
      %616 = vmatpush2.msra.mxu0 0.0
      %617 = vmatprep.subr.mxu0 0.0
      %618 = vmatpush2.msra.mxu0 0.0
      %619 = vmatprep.subr.mxu0 0.0
      %620 = vmatpush2.msra.mxu0 0.0
      %621 = vmatprep.subr.mxu0 0.0
      %622 = vmatpush2.msra.mxu0 0.0
      %623 = vmatprep.subr.mxu0 0.0
      %624 = vmatpush2.msra.mxu0 0.0
      %625 = vmatprep.subr.mxu0 0.0
      %626 = vmatpush2.msra.mxu0 0.0
      %627 = vmatprep.subr.mxu0 0.0
      %628 = vmatpush2.msra.mxu0 0.0
      %629 = vmatprep.subr.mxu0 0.0
      %630 = vmatpush2.msra.mxu0 0.0
      %631 = vmatprep.subr.mxu0 0.0
      %632 = vmatpush2.msra.mxu0 0.0
      %633 = vmatprep.subr.mxu0 0.0
      %634 = vmatpush2.msra.mxu0 0.0
      %635 = vmatprep.subr.mxu0 0.0
      %636 = vmatpush2.msra.mxu0 0.0
      %637 = vmatprep.subr.mxu0 0.0
      %638 = vmatpush2.msra.mxu0 0.0
      %639 = vmatprep.subr.mxu0 0.0
      %640 = vmatpush2.msra.mxu0 0.0
      %641 = vmatprep.mubr.f32.mxu0 0.0
      %642 = vmatmul.mubr.f32.gmra.mxu0 %v530
      %v643 = vpop.f32.mrf.mxu0
      %v644 = vadd.f32 %v526, %v643
      %v645 = vpop.f32.mrf.mxu0
      %646 = vmatprep.mubr.f32.mxu0 0.0
      %647 = vmatmul.mubr.f32.gmra.mxu0 %v533
      %v648 = vpop.f32.mrf.mxu0
      %v649 = vadd.f32 %v526, %v648
      %v650 = vpop.f32.mrf.mxu0
      %651 = vmatprep.mubr.f32.mxu0 0.0
      %652 = vmatmul.mubr.f32.gmra.mxu0 %v536
      %v653 = vpop.f32.mrf.mxu0
      %v654 = vadd.f32 %v526, %v653
      %v655 = vpop.f32.mrf.mxu0
      %656 = vmatprep.mubr.f32.mxu0 0.0
      %657 = vmatmul.mubr.f32.gmra.mxu0 %v539
      %v658 = vpop.f32.mrf.mxu0
      %v659 = vadd.f32 %v526, %v658
      %v660 = vpop.f32.mrf.mxu0
      %661 = vmatprep.mubr.f32.mxu0 0.0
      %662 = vmatmul.mubr.f32.gmra.mxu0 %v542
      %v663 = vpop.f32.mrf.mxu0
      %v664 = vadd.f32 %v526, %v663
      %v665 = vpop.f32.mrf.mxu0
      %666 = vmatprep.mubr.f32.mxu0 0.0
      %667 = vmatmul.mubr.f32.gmra.mxu0 %v545
      %v668 = vpop.f32.mrf.mxu0
      %v669 = vadd.f32 %v526, %v668
      %v670 = vpop.f32.mrf.mxu0
      %671 = vmatprep.mubr.f32.mxu0 0.0
      %672 = vmatmul.mubr.f32.gmra.mxu0 %v548
      %v673 = vpop.f32.mrf.mxu0
      %v674 = vadd.f32 %v526, %v673
      %v675 = vpop.f32.mrf.mxu0
      %676 = vmatprep.mubr.f32.mxu0 0.0
      %677 = vmatmul.mubr.f32.gmra.mxu0 %v551
      %v678 = vpop.f32.mrf.mxu0
      %v679 = vadd.f32 %v526, %v678
      %v680 = vpop.f32.mrf.mxu0
      %681 = vmatprep.mubr.f32.mxu0 0.0
      %682 = vmatmul.mubr.f32.gmra.mxu0 %v554
      %v683 = vpop.f32.mrf.mxu0
      %v684 = vadd.f32 %v526, %v683
      %v685 = vpop.f32.mrf.mxu0
      %686 = vmatprep.mubr.f32.mxu0 0.0
      %687 = vmatmul.mubr.f32.gmra.mxu0 %v557
      %v688 = vpop.f32.mrf.mxu0
      %v689 = vadd.f32 %v526, %v688
      %v690 = vpop.f32.mrf.mxu0
      %691 = vmatprep.mubr.f32.mxu0 0.0
      %692 = vmatmul.mubr.f32.gmra.mxu0 %v560
      %v693 = vpop.f32.mrf.mxu0
      %v694 = vadd.f32 %v526, %v693
      %v695 = vpop.f32.mrf.mxu0
      %696 = vmatprep.mubr.f32.mxu0 0.0
      %697 = vmatmul.mubr.f32.gmra.mxu0 %v563
      %v698 = vpop.f32.mrf.mxu0
      %v699 = vadd.f32 %v526, %v698
      %v700 = vpop.f32.mrf.mxu0
      %701 = vmatprep.mubr.f32.mxu0 0.0
      %702 = vmatmul.mubr.f32.gmra.mxu0 %v566
      %v703 = vpop.f32.mrf.mxu0
      %v704 = vadd.f32 %v526, %v703
      %v705 = vpop.f32.mrf.mxu0
      %706 = vmatprep.mubr.f32.mxu0 0.0
      %707 = vmatmul.mubr.f32.gmra.mxu0 %v569
      %v708 = vpop.f32.mrf.mxu0
      %v709 = vadd.f32 %v526, %v708
      %v710 = vpop.f32.mrf.mxu0
      %711 = vmatprep.mubr.f32.mxu0 0.0
      %712 = vmatmul.mubr.f32.gmra.mxu0 %v572
      %v713 = vpop.f32.mrf.mxu0
      %v714 = vadd.f32 %v526, %v713
      %v715 = vpop.f32.mrf.mxu0
      %716 = vmatprep.mubr.f32.mxu0 0.0
      %717 = vmatmul.mubr.f32.gmra.mxu0 %v575
      %v718 = vpop.f32.mrf.mxu0
      %v719 = vadd.f32 %v526, %v718
      %v720 = vpop.f32.mrf.mxu0
      %721 = vdwg.mxu0
      %v722 = vtanh.pop %v644
      %v723 = vtanh.pop %v649
      %v724 = vtanh.pop %v654
      %v725 = vtanh.pop %v659
      %v726 = vtanh.pop %v664
      %v727 = vtanh.pop %v669
      %v728 = vtanh.pop %v674
      %v729 = vtanh.pop %v679
      %v730 = vtanh.pop %v684
      %v731 = vtanh.pop %v689
      %v732 = vtanh.pop %v694
      %v733 = vtanh.pop %v699
      %v734 = vtanh.pop %v704
      %v735 = vtanh.pop %v709
      %v736 = vtanh.pop %v714
      %v737 = vtanh.pop %v719
      %v738 = vld [vmem:[%s5] sm:$0xff]
      %v739 = vld [vmem:[%s5 + $0x8] sm:$0xff]
      %v740 = vld [vmem:[%s5 + $0x10] sm:$0xff]
      %v741 = vld [vmem:[%s5 + $0x18] sm:$0xff]
      %v742 = vld [vmem:[%s6] sm:$0x1]
      %v744 = vlaneseq
      %v745 = vshrl.u32 %v744, 7
      %v746 = vsub.s32 0, %v745
      %v747 = vrot.slane %v742, %v746
      %v750 = vsel %vm528, %v722, 0
      %v753 = vsel %vm528, %v723, 0
      %v756 = vsel %vm528, %v724, 0
      %v759 = vsel %vm528, %v725, 0
      %v762 = vsel %vm528, %v726, 0
      %v765 = vsel %vm528, %v727, 0
      %v768 = vsel %vm528, %v728, 0
      %v771 = vsel %vm528, %v729, 0
      %v774 = vsel %vm528, %v730, 0
      %v777 = vsel %vm528, %v731, 0
      %v780 = vsel %vm528, %v732, 0
      %v783 = vsel %vm528, %v733, 0
      %v786 = vsel %vm528, %v734, 0
      %v789 = vsel %vm528, %v735, 0
      %v792 = vsel %vm528, %v736, 0
      %v795 = vsel %vm528, %v737, 0
      %797 = vmatprep.subr.mxu0 0.0
      %798 = vmatpush1.msra.mxu0 0.0
      %799 = vmatprep.subr.mxu0 0.0
      %800 = vmatpush1.msra.mxu0 0.0
      %801 = vmatprep.subr.mxu0 0.0
      %802 = vmatpush1.msra.mxu0 0.0
      %803 = vmatprep.subr.mxu0 0.0
      %804 = vmatpush1.msra.mxu0 0.0
      %805 = vmatprep.subr.mxu0 0.0
      %806 = vmatpush1.msra.mxu0 0.0
      %807 = vmatprep.subr.mxu0 0.0
      %808 = vmatpush1.msra.mxu0 0.0
      %809 = vmatprep.subr.mxu0 0.0
      %810 = vmatpush1.msra.mxu0 0.0
      %811 = vmatprep.subr.mxu0 0.0
      %812 = vmatpush1.msra.mxu0 0.0
      %813 = vmatprep.subr.mxu0 0.0
      %814 = vmatpush1.msra.mxu0 0.0
      %815 = vmatprep.subr.mxu0 0.0
      %816 = vmatpush1.msra.mxu0 0.0
      %817 = vmatprep.subr.mxu0 0.0
      %818 = vmatpush1.msra.mxu0 0.0
      %819 = vmatprep.subr.mxu0 0.0
      %820 = vmatpush1.msra.mxu0 0.0
      %821 = vmatprep.subr.mxu0 0.0
      %822 = vmatpush1.msra.mxu0 %v741
      %823 = vmatprep.subr.mxu0 0.0
      %824 = vmatpush1.msra.mxu0 %v740
      %825 = vmatprep.subr.mxu0 0.0
      %826 = vmatpush1.msra.mxu0 %v739
      %827 = vmatprep.subr.mxu0 0.0
      %828 = vmatpush1.msra.mxu0 %v738
      %829 = vmatprep.subr.mxu0 0.0
      %830 = vmatpush2.msra.mxu0 0.0
      %831 = vmatprep.subr.mxu0 0.0
      %832 = vmatpush2.msra.mxu0 0.0
      %833 = vmatprep.subr.mxu0 0.0
      %834 = vmatpush2.msra.mxu0 0.0
      %835 = vmatprep.subr.mxu0 0.0
      %836 = vmatpush2.msra.mxu0 0.0
      %837 = vmatprep.subr.mxu0 0.0
      %838 = vmatpush2.msra.mxu0 0.0
      %839 = vmatprep.subr.mxu0 0.0
      %840 = vmatpush2.msra.mxu0 0.0
      %841 = vmatprep.subr.mxu0 0.0
      %842 = vmatpush2.msra.mxu0 0.0
      %843 = vmatprep.subr.mxu0 0.0
      %844 = vmatpush2.msra.mxu0 0.0
      %845 = vmatprep.subr.mxu0 0.0
      %846 = vmatpush2.msra.mxu0 0.0
      %847 = vmatprep.subr.mxu0 0.0
      %848 = vmatpush2.msra.mxu0 0.0
      %849 = vmatprep.subr.mxu0 0.0
      %850 = vmatpush2.msra.mxu0 0.0
      %851 = vmatprep.subr.mxu0 0.0
      %852 = vmatpush2.msra.mxu0 0.0
      %853 = vmatprep.subr.mxu0 0.0
      %854 = vmatpush2.msra.mxu0 0.0
      %855 = vmatprep.subr.mxu0 0.0
      %856 = vmatpush2.msra.mxu0 0.0
      %857 = vmatprep.subr.mxu0 0.0
      %858 = vmatpush2.msra.mxu0 0.0
      %859 = vmatprep.subr.mxu0 0.0
      %860 = vmatpush2.msra.mxu0 0.0
      %861 = vmatprep.mubr.f32.mxu0 0.0
      %862 = vmatmul.mubr.f32.gmra.mxu0 %v750
      %v863 = vpop.f32.mrf.mxu0
      %v864 = vadd.f32 %v747, %v863
      %v865 = vpop.f32.mrf.mxu0
      %866 = vmatprep.mubr.f32.mxu0 0.0
      %867 = vmatmul.mubr.f32.gmra.mxu0 %v753
      %v868 = vpop.f32.mrf.mxu0
      %v869 = vadd.f32 %v747, %v868
      %v870 = vpop.f32.mrf.mxu0
      %871 = vmatprep.mubr.f32.mxu0 0.0
      %872 = vmatmul.mubr.f32.gmra.mxu0 %v756
      %v873 = vpop.f32.mrf.mxu0
      %v874 = vadd.f32 %v747, %v873
      %v875 = vpop.f32.mrf.mxu0
      %876 = vmatprep.mubr.f32.mxu0 0.0
      %877 = vmatmul.mubr.f32.gmra.mxu0 %v759
      %v878 = vpop.f32.mrf.mxu0
      %v879 = vadd.f32 %v747, %v878
      %v880 = vpop.f32.mrf.mxu0
      %881 = vmatprep.mubr.f32.mxu0 0.0
      %882 = vmatmul.mubr.f32.gmra.mxu0 %v762
      %v883 = vpop.f32.mrf.mxu0
      %v884 = vadd.f32 %v747, %v883
      %v885 = vpop.f32.mrf.mxu0
      %886 = vmatprep.mubr.f32.mxu0 0.0
      %887 = vmatmul.mubr.f32.gmra.mxu0 %v765
      %v888 = vpop.f32.mrf.mxu0
      %v889 = vadd.f32 %v747, %v888
      %v890 = vpop.f32.mrf.mxu0
      %891 = vmatprep.mubr.f32.mxu0 0.0
      %892 = vmatmul.mubr.f32.gmra.mxu0 %v768
      %v893 = vpop.f32.mrf.mxu0
      %v894 = vadd.f32 %v747, %v893
      %v895 = vpop.f32.mrf.mxu0
      %896 = vmatprep.mubr.f32.mxu0 0.0
      %897 = vmatmul.mubr.f32.gmra.mxu0 %v771
      %v898 = vpop.f32.mrf.mxu0
      %v899 = vadd.f32 %v747, %v898
      %v900 = vpop.f32.mrf.mxu0
      %901 = vmatprep.mubr.f32.mxu0 0.0
      %902 = vmatmul.mubr.f32.gmra.mxu0 %v774
      %v903 = vpop.f32.mrf.mxu0
      %v904 = vadd.f32 %v747, %v903
      %v905 = vpop.f32.mrf.mxu0
      %906 = vmatprep.mubr.f32.mxu0 0.0
      %907 = vmatmul.mubr.f32.gmra.mxu0 %v777
      %v908 = vpop.f32.mrf.mxu0
      %v909 = vadd.f32 %v747, %v908
      %v910 = vpop.f32.mrf.mxu0
      %911 = vmatprep.mubr.f32.mxu0 0.0
      %912 = vmatmul.mubr.f32.gmra.mxu0 %v780
      %v913 = vpop.f32.mrf.mxu0
      %v914 = vadd.f32 %v747, %v913
      %v915 = vpop.f32.mrf.mxu0
      %916 = vmatprep.mubr.f32.mxu0 0.0
      %917 = vmatmul.mubr.f32.gmra.mxu0 %v783
      %v918 = vpop.f32.mrf.mxu0
      %v919 = vadd.f32 %v747, %v918
      %v920 = vpop.f32.mrf.mxu0
      %921 = vmatprep.mubr.f32.mxu0 0.0
      %922 = vmatmul.mubr.f32.gmra.mxu0 %v786
      %v923 = vpop.f32.mrf.mxu0
      %v924 = vadd.f32 %v747, %v923
      %v925 = vpop.f32.mrf.mxu0
      %926 = vmatprep.mubr.f32.mxu0 0.0
      %927 = vmatmul.mubr.f32.gmra.mxu0 %v789
      %v928 = vpop.f32.mrf.mxu0
      %v929 = vadd.f32 %v747, %v928
      %v930 = vpop.f32.mrf.mxu0
      %931 = vmatprep.mubr.f32.mxu0 0.0
      %932 = vmatmul.mubr.f32.gmra.mxu0 %v792
      %v933 = vpop.f32.mrf.mxu0
      %v934 = vadd.f32 %v747, %v933
      %v935 = vpop.f32.mrf.mxu0
      %936 = vmatprep.mubr.f32.mxu0 0.0
      %937 = vmatmul.mubr.f32.gmra.mxu0 %v795
      %v938 = vpop.f32.mrf.mxu0
      %v939 = vadd.f32 %v747, %v938
      %v940 = vpop.f32.mrf.mxu0
      %941 = vdwg.mxu0
      %vm942 = vcmask 64512
      %943 = vst.msk [vmem:[%s280] sm:$0xff] %vm942, %v864
      %944 = vst.msk [vmem:[%s280 + $0x8] sm:$0xff] %vm942, %v869
      %945 = vst.msk [vmem:[%s280 + $0x10] sm:$0xff] %vm942, %v874
      %946 = vst.msk [vmem:[%s280 + $0x18] sm:$0xff] %vm942, %v879
      %947 = vst.msk [vmem:[%s280 + $0x20] sm:$0xff] %vm942, %v884
      %948 = vst.msk [vmem:[%s280 + $0x28] sm:$0xff] %vm942, %v889
      %949 = vst.msk [vmem:[%s280 + $0x30] sm:$0xff] %vm942, %v894
      %950 = vst.msk [vmem:[%s280 + $0x38] sm:$0xff] %vm942, %v899
      %951 = vst.msk [vmem:[%s280 + $0x40] sm:$0xff] %vm942, %v904
      %952 = vst.msk [vmem:[%s280 + $0x48] sm:$0xff] %vm942, %v909
      %953 = vst.msk [vmem:[%s280 + $0x50] sm:$0xff] %vm942, %v914
      %954 = vst.msk [vmem:[%s280 + $0x58] sm:$0xff] %vm942, %v919
      %955 = vst.msk [vmem:[%s280 + $0x60] sm:$0xff] %vm942, %v924
      %956 = vst.msk [vmem:[%s280 + $0x68] sm:$0xff] %vm942, %v929
      %957 = vst.msk [vmem:[%s280 + $0x70] sm:$0xff] %vm942, %v934
      %958 = vst.msk [vmem:[%s280 + $0x78] sm:$0xff] %vm942, %v939
      %s959 = smul.u32 16, %s18
      %p960 = scmp.lt.s32.totalorder %s959, 31
      %s961 = scalar_select %p960, %s959, 31
      %s962 = smul.addr %s961, 8
      %s963 = scalar_lea.vmem %s7, %s962
      // Predicated region
      $region49: #{tpu_custom_call.1} parent=47 // pred_check
        %p964 = pneg %p188
      $region50: #{tpu_custom_call.1} parent=47 // pred_check_branch
        %966 = sbr.rel (%p964) target = $region52
      $region51: #{tpu_custom_call.1} parent=47 // pred_region
        %s967 = smul.u32 16, %s18
      $region52: #{tpu_custom_call.1} parent=47 // pred_fallthru
        _
    $region48: #{tpu_custom_call.1} parent=5 // pred_fallthru
      _
    %p968 = scmp.le.s32.totalorder 2, %s13
    // Predicated region
    $region53: #{tpu_custom_call.1} parent=5 // pred_check
      %p969 = pneg %p968
    $region54: #{tpu_custom_call.1} parent=5 // pred_check_branch
      %971 = sbr.rel (%p969) target = $region56
    $region55: #{tpu_custom_call.1} parent=5 // pred_region
      %s972 = ssub.s32 %s13, 2
      // Predicated region
      $region57: #{tpu_custom_call.1} parent=55 // pred_check
        %p973 = pneg %p194
      $region58: #{tpu_custom_call.1} parent=55 // pred_check_branch
        %975 = sbr.rel (%p973) target = $region60
      $region59: #{tpu_custom_call.1} parent=55 // pred_region
        %s976 = smul.u32 16, %s19
        %p977 = scmp.lt.s32.totalorder %s976, 31
        %s978 = scalar_select %p977, %s976, 31
        %s979 = smul.addr %s978, 8
        %s980 = scalar_lea.vmem %s7, %s979
      $region60: #{tpu_custom_call.1} parent=55 // pred_fallthru
        _
    $region56: #{tpu_custom_call.1} parent=5 // pred_fallthru
      _
  $region6: #{tpu_custom_call.1} parent=0 // loop_footer
    %s17 = sadd.s32 1, %s13
  $region7: #{tpu_custom_call.1} parent=0 // loop_footer_branch
    %12 = sbr.rel target = $region3
  $region8: #{tpu_custom_call.1} parent=0 // loop_exit
    _

</llo_original>
